<compile_context>
chip_gen: v7x
topology: tpu7x:2x2x1
jax: 0.10.0
libtpu: 0.0.40
codegen_flags: <defaults>
</compile_context>

<pallas_src>
import functools

import jax
import jax.numpy as jnp
from jax.experimental import pallas as pl
from jax.experimental.pallas import tpu as pltpu


def _round_up(x, m):
    return ((x + m - 1) // m) * m


def _acceptance_kernel(ids_ref, h_ref, w_ref, b_ref, o_ref, acc_ref,
                       *, padding_id, inv_seq_len):
    # ids_ref: (1, tS, 1) int32      h_ref: (1, tS, H)
    # w_ref:   (H, 2) f32            b_ref: (1, 2) f32
    # o_ref:   (1, 1, 2) f32         acc_ref: (1, H) f32 scratch
    s_idx = pl.program_id(1)

    @pl.when(s_idx == 0)
    def _():
        acc_ref[...] = jnp.zeros_like(acc_ref)

    ids = ids_ref[...]                                   # (1, tS, 1)
    h = h_ref[...]                                       # (1, tS, H)
    # ids broadcast along lanes (last dim); no float mask materialized.
    masked = jnp.where(ids == padding_id, jnp.array(0, h.dtype), h)
    # Accumulate masked sum over this sequence tile in f32.
    acc_ref[...] += jnp.sum(masked, axis=1, dtype=jnp.float32)   # (1, H)

    @pl.when(s_idx == pl.num_programs(1) - 1)
    def _():
        # torch.mean over dim=1 divides by the FULL (original) sequence length.
        pooled = acc_ref[...] * inv_seq_len                       # (1, H)
        logits = jnp.dot(pooled, w_ref[...],
                         preferred_element_type=jnp.float32) + b_ref[...]
        o_ref[...] = logits.reshape(o_ref.shape).astype(o_ref.dtype)


def acceptance_predictor(decoder_last_hidden_state, decoder_input_ids,
                         weight, bias, padding_id,
                         *, target_tile_bytes=8 * 1024 * 1024):
    """decoder_last_hidden_state: [B, S, H] (f32 or bf16)
       decoder_input_ids:         [B, S]    integer ids
       weight:                    [2, H]    f32 (PyTorch nn.Linear layout)
       bias:                      [2]       f32
       returns logits:            [B, 2]    f32
    """
    B, S, H = decoder_last_hidden_state.shape
    h_dtype = decoder_last_hidden_state.dtype
    itemsize = jnp.dtype(h_dtype).itemsize

    # --- choose sequence tile: multiple of 8 rows, ~target_tile_bytes per
    # hidden block (8 MiB => 16 MiB double-buffered => fits every generation).
    rows = (target_tile_bytes // (H * itemsize)) // 8 * 8
    rows = max(8, min(int(rows), 2048))
    t_s = int(min(rows, _round_up(S, 8)))
    s_pad = _round_up(S, t_s)

    hidden = decoder_last_hidden_state
    ids = decoder_input_ids
    if s_pad != S:
        pad = s_pad - S
        hidden = jnp.pad(hidden, ((0, 0), (0, pad), (0, 0)))
        # Pad ids with padding_id so padded positions are masked to zero.
        ids = jnp.pad(ids, ((0, 0), (0, pad)), constant_values=padding_id)

    # [B, S, 1] so the mask broadcasts along the lane (hidden) axis for free.
    ids3d = ids.reshape(B, s_pad, 1).astype(jnp.int32)
    w_t = weight.astype(jnp.float32).T                 # [H, 2]
    b2d = bias.astype(jnp.float32).reshape(1, 2)       # [1, 2]

    num_s_tiles = s_pad // t_s
    kernel = functools.partial(_acceptance_kernel,
                               padding_id=int(padding_id),
                               inv_seq_len=1.0 / float(S))

    out = pl.pallas_call(
        kernel,
        out_shape=jax.ShapeDtypeStruct((B, 1, 2), jnp.float32),
        grid_spec=pltpu.PrefetchScalarGridSpec(
            num_scalar_prefetch=0,
            grid=(B, num_s_tiles),
            in_specs=[
                # ids: (1, tS, 1) per step
                pl.BlockSpec((1, t_s, 1), lambda b, s: (b, s, 0)),
                # hidden: (1, tS, H) per step -- the streamed tensor
                pl.BlockSpec((1, t_s, H), lambda b, s: (b, s, 0)),
                # weight.T / bias: constant block, stays VMEM-resident
                pl.BlockSpec((H, 2), lambda b, s: (0, 0)),
                pl.BlockSpec((1, 2), lambda b, s: (0, 0)),
            ],
            out_specs=pl.BlockSpec((1, 1, 2), lambda b, s: (b, 0, 0)),
            scratch_shapes=[pltpu.VMEM((1, H), jnp.float32)],
        ),
        compiler_params=pltpu.CompilerParams(
            # batch -> parallel (megacore on v7x), seq -> reduction.
            dimension_semantics=("parallel", "arbitrary"),
            vmem_limit_bytes=32 * 1024 * 1024,
        ),
    )(ids3d, hidden, w_t, b2d)

    return out.reshape(B, 2)


def _reference(hidden, ids, weight, bias, padding_id):
    mask = jnp.where(ids == padding_id, 0.0, 1.0).astype(jnp.float32)
    pooled = jnp.mean(hidden.astype(jnp.float32) * mask[:, :, None], axis=1)
    return pooled @ weight.T + bias


if __name__ == "__main__":
    B, S, H = 2, 8, 32
    padding_id = 1

    key = jax.random.PRNGKey(0)
    k_h, k_ids, k_w, k_b = jax.random.split(key, 4)

    hidden = jax.random.normal(k_h, (B, S, H), dtype=jnp.float32)
    ids = jax.random.randint(k_ids, (B, S), 0, 5, dtype=jnp.int32)

    # Deterministic parameter init mirroring the module's __init__:
    #   weight: xavier_uniform_ over shape [2, H]
    #   bias:   PyTorch Linear default uniform(-1/sqrt(H), 1/sqrt(H))
    xavier_limit = (6.0 / (H + 2)) ** 0.5
    weight = jax.random.uniform(k_w, (2, H), jnp.float32,
                                minval=-xavier_limit, maxval=xavier_limit)
    bias_limit = 1.0 / (H ** 0.5)
    bias = jax.random.uniform(k_b, (2,), jnp.float32,
                              minval=-bias_limit, maxval=bias_limit)

    logits = acceptance_predictor(hidden, ids, weight, bias, padding_id)
    logits = jax.block_until_ready(logits)

    expected = _reference(hidden, ids, weight, bias, padding_id)
    assert logits.shape == (B, 2)
    assert jnp.allclose(logits, expected, atol=1e-5, rtol=1e-5), (
        f"mismatch: {logits} vs {expected}")

    print("KERNEL_OK")
</pallas_src>

<mosaic_0001>
module attributes {stable_mosaic.version = 11 : i64} {
  func.func @_acceptance_kernel(%arg0: i32, %arg1: i32, %arg2: memref<1x8x1xi32, #tpu.memory_space<vmem>>, %arg3: memref<1x8x32xf32, #tpu.memory_space<vmem>>, %arg4: memref<32x2xf32, #tpu.memory_space<vmem>>, %arg5: memref<1x2xf32, #tpu.memory_space<vmem>>, %arg6: memref<1x1x2xf32, #tpu.memory_space<vmem>>, %arg7: memref<1x32xf32, #tpu.memory_space<vmem>>) attributes {dimension_semantics = [#tpu.dimension_semantics<parallel>, #tpu.dimension_semantics<arbitrary>], iteration_bounds = array<i64: 2, 1>, scalar_prefetch = 0 : i64, scratch_operands = 1 : i64, tpu.core_type = #tpu.core_type<tc>, window_params = [{transform_indices = @transform_0, window_bounds = array<i64: 1, 8, 1>}, {transform_indices = @transform_1, window_bounds = array<i64: 1, 8, 32>}, {pipeline_mode = #tpu.pipeline_mode<synchronous>, transform_indices = @transform_2, window_bounds = array<i64: 32, 2>}, {pipeline_mode = #tpu.pipeline_mode<synchronous>, transform_indices = @transform_3, window_bounds = array<i64: 1, 2>}, {transform_indices = @transform_4, window_bounds = array<i64: 1, 1, 2>}]} {
    %c0_i32 = arith.constant 0 : i32
    %0 = arith.cmpi eq, %arg1, %c0_i32 : i32
    %1 = arith.extui %0 : i1 to i32
    %c0_i32_0 = arith.constant 0 : i32
    %2 = arith.cmpi ne, %1, %c0_i32_0 : i32
    scf.if %2 {
      %cst_13 = arith.constant 0.000000e+00 : f32
      %18 = vector.broadcast %cst_13 : f32 to vector<1x32xf32>
      %c0_14 = arith.constant 0 : index
      %c0_15 = arith.constant 0 : index
      %19 = vector.load %arg7[%c0_14, %c0_15] : memref<1x32xf32, #tpu.memory_space<vmem>>, vector<1x32xf32>
      tpu.vector_store %arg7[%c0_14, %c0_15], %18 {strides = array<i32>} : memref<1x32xf32, #tpu.memory_space<vmem>>, vector<1x32xf32>,
    } else {
    }
    %c0 = arith.constant 0 : index
    %c0_1 = arith.constant 0 : index
    %c0_2 = arith.constant 0 : index
    %3 = vector.load %arg2[%c0, %c0_1, %c0_2] : memref<1x8x1xi32, #tpu.memory_space<vmem>>, vector<1x8x1xi32>
    %c0_3 = arith.constant 0 : index
    %c0_4 = arith.constant 0 : index
    %c0_5 = arith.constant 0 : index
    %4 = vector.load %arg3[%c0_3, %c0_4, %c0_5] : memref<1x8x32xf32, #tpu.memory_space<vmem>>, vector<1x8x32xf32>
    %c1_i32 = arith.constant 1 : i32
    %5 = vector.broadcast %c1_i32 : i32 to vector<1x8x1xi32>
    %6 = arith.cmpi eq, %3, %5 : vector<1x8x1xi32>
    %cst = arith.constant 0.000000e+00 : f32
    %7 = vector.shape_cast %6 : vector<1x8x1xi1> to vector<1x8x1xi1>
    %8 = vector.broadcast %7 : vector<1x8x1xi1> to vector<1x8x32xi1>
    %9 = vector.broadcast %cst : f32 to vector<1x8x32xf32>
    %10 = arith.select %8, %9, %4 : vector<1x8x32xi1>, vector<1x8x32xf32>
    %c0_6 = arith.constant 0 : index
    %c0_7 = arith.constant 0 : index
    %11 = vector.load %arg7[%c0_6, %c0_7] : memref<1x32xf32, #tpu.memory_space<vmem>>, vector<1x32xf32>
    %cst_8 = arith.constant dense<0.000000e+00> : vector<1x32xf32>
    %12 = vector.multi_reduction <add>, %10, %cst_8 [1] : vector<1x8x32xf32> to vector<1x32xf32>
    %13 = arith.addf %11, %12 : vector<1x32xf32>
    %c0_9 = arith.constant 0 : index
    %c0_10 = arith.constant 0 : index
    %14 = vector.load %arg7[%c0_9, %c0_10] : memref<1x32xf32, #tpu.memory_space<vmem>>, vector<1x32xf32>
    tpu.vector_store %arg7[%c0_9, %c0_10], %13 {strides = array<i32>} : memref<1x32xf32, #tpu.memory_space<vmem>>, vector<1x32xf32>,
    %c0_i32_11 = arith.constant 0 : i32
    %15 = arith.cmpi eq, %arg1, %c0_i32_11 : i32
    %16 = arith.extui %15 : i1 to i32
    %c0_i32_12 = arith.constant 0 : i32
    %17 = arith.cmpi ne, %16, %c0_i32_12 : i32
    scf.if %17 {
      %c0_13 = arith.constant 0 : index
      %c0_14 = arith.constant 0 : index
      %18 = vector.load %arg7[%c0_13, %c0_14] : memref<1x32xf32, #tpu.memory_space<vmem>>, vector<1x32xf32>
      %cst_15 = arith.constant 1.250000e-01 : f32
      %19 = vector.broadcast %cst_15 : f32 to vector<1x32xf32>
      %20 = arith.mulf %18, %19 : vector<1x32xf32>
      %c0_16 = arith.constant 0 : index
      %c0_17 = arith.constant 0 : index
      %21 = vector.load %arg4[%c0_16, %c0_17] : memref<32x2xf32, #tpu.memory_space<vmem>>, vector<32x2xf32>
      %cst_18 = arith.constant dense<0.000000e+00> : vector<1x2xf32>
      %22 = tpu.matmul %20, %21, %cst_18 {dimension_numbers = #tpu.dot_dimension_numbers<[1], [0], [0], [1], [0, 0, 1, 1], [], []>} : vector<1x32xf32>, vector<32x2xf32>, vector<1x2xf32> -> vector<1x2xf32>
      %c0_19 = arith.constant 0 : index
      %c0_20 = arith.constant 0 : index
      %23 = vector.load %arg5[%c0_19, %c0_20] : memref<1x2xf32, #tpu.memory_space<vmem>>, vector<1x2xf32>
      %24 = arith.addf %22, %23 : vector<1x2xf32>
      %25 = vector.shape_cast %24 : vector<1x2xf32> to vector<1x1x2xf32>
      %c0_21 = arith.constant 0 : index
      %c0_22 = arith.constant 0 : index
      %c0_23 = arith.constant 0 : index
      %26 = vector.load %arg6[%c0_21, %c0_22, %c0_23] : memref<1x1x2xf32, #tpu.memory_space<vmem>>, vector<1x1x2xf32>
      tpu.vector_store %arg6[%c0_21, %c0_22, %c0_23], %25 {strides = array<i32>} : memref<1x1x2xf32, #tpu.memory_space<vmem>>, vector<1x1x2xf32>,
    } else {
    }
    return
  }
  func.func @transform_0(%arg0: i32, %arg1: i32) -> (i32, i32, i32) {
    %c0_i32 = arith.constant 0 : i32
    %c0_i32_0 = arith.constant 0 : i32
    return %arg0, %arg1, %c0_i32 : i32, i32, i32
  }
  func.func @transform_1(%arg0: i32, %arg1: i32) -> (i32, i32, i32) {
    %c0_i32 = arith.constant 0 : i32
    %c0_i32_0 = arith.constant 0 : i32
    return %arg0, %arg1, %c0_i32 : i32, i32, i32
  }
  func.func @transform_2(%arg0: i32, %arg1: i32) -> (i32, i32) {
    %c0_i32 = arith.constant 0 : i32
    %c0_i32_0 = arith.constant 0 : i32
    %c0_i32_1 = arith.constant 0 : i32
    return %c0_i32, %c0_i32_0 : i32, i32
  }
  func.func @transform_3(%arg0: i32, %arg1: i32) -> (i32, i32) {
    %c0_i32 = arith.constant 0 : i32
    %c0_i32_0 = arith.constant 0 : i32
    %c0_i32_1 = arith.constant 0 : i32
    return %c0_i32, %c0_i32_0 : i32, i32
  }
  func.func @transform_4(%arg0: i32, %arg1: i32) -> (i32, i32, i32) {
    %c0_i32 = arith.constant 0 : i32
    %c0_i32_0 = arith.constant 0 : i32
    %c0_i32_1 = arith.constant 0 : i32
    return %arg0, %c0_i32, %c0_i32_0 : i32, i32, i32
  }
}

</mosaic_0001>

<llo_original>
// kernel: tpu_custom_call.1
$region0: #{tpu_custom_call.1}
  #allocation0 [shape = 'u32[]', space=smem, size = 0x4, offset = 0x4, fixed_abs, tag = 'smem constant byte address 0x4 - core index']
  #allocation1 [shape = 'u32[144,128]{1,0:T(1,128)}', space=vmem, size = 0x12000, scoped, tag = 'internal scratch']
  #allocation2 [shape = 'f32[1,32]{1,0:T(1,128)}', space=vmem, size = 0x200, scoped, tag = 'scratch operand']
  %s0 = inlined_call_operand.vmem [shape: s32[2,8,1], index: 0, kind: input, shape index: {}]
  %s1 = inlined_call_operand.vmem [shape: f32[2,8,32], index: 1, kind: input, shape index: {}]
  %s2 = inlined_call_operand.vmem [shape: f32[32,2], index: 2, kind: input, shape index: {}]
  %s3 = inlined_call_operand.vmem [shape: f32[1,2], index: 3, kind: input, shape index: {}]
  %s4 = inlined_call_operand.hbm [shape: f32[2,1,2], index: 4, kind: output, shape index: {}]
  %s5 = sld [smem:[#allocation0]]
  $region57: #{tpu_custom_call.1} parent=0
    _
  %s7 = ssub.s32 1, %s5
  %s8 = scalar_select 0, %s7, %s5
  $region1: #{tpu_custom_call.1} parent=0
    #allocation3 [shape = 'u8[1024]{0}', space=vmem, size = 0x400, scoped, tag = 'output window, operand 0']
    #allocation4 [shape = 's32[2]{0}', space=sflag, size = 0x8, scoped, tag = 'scoped memory for tpu_custom_call.1']
    %9 = vsyncpa [#allocation4], 0
    %s10 = scalar_lea.sflag [#allocation4], 1
    %11 = vsyncpa %s10, 0
    loop: start=0, step=1, limit=4
    $region2: #{tpu_custom_call.1} parent=1 // loop_pre_header
      _
    $region3: #{tpu_custom_call.1} parent=1 // loop_header
      %s13 = sphi 0, %s17
      %p14 = scmp.ge.s32.totalorder %s13, 4
      %s20 = sphi 0, %s32
      %s21 = sphi 0, %s28
      %s22 = sphi 0, %s20
      %s23 = sphi 0, %s21
      %s24 = sphi 0, %s22
      %s25 = sphi 0, %s23
      %s37 = sphi 0, %s39
      %s40 = sphi 0, %s37
      %s41 = sphi 0, %s40
      %s57 = sphi 0, %s41
      %s65 = sphi 0, %s67
      %s68 = sphi 0, %s65
      %s69 = sphi 0, %s68
      %s85 = sphi 0, %s69
      %s89 = sphi 0, %s89
      %s91 = sphi 0, %s89
      %s92 = sphi 0, %s91
      %s106 = sphi 0, %s92
      %s110 = sphi 0, %s110
      %s112 = sphi 0, %s110
      %s113 = sphi 0, %s112
      %s127 = sphi 0, %s113
      %s133 = sphi 0, %s135
      %s136 = sphi 0, %s133
      %s137 = sphi 0, %s136
      %s153 = sphi 0, %s137
    $region4: #{tpu_custom_call.1} parent=1 // loop_header_branch
      %16 = sbr.rel (%p14) target = $region8
    $region5: #{tpu_custom_call.1} parent=1 // loop_body
      %s18 = ssub.s32 %s13, 1
      %s19 = ssub.s32 %s13, 2
      %s26 = sadd.s32 1, %s21
      %p27 = scmp.ge.s32.totalorder %s26, 1
      %s28 = scalar_select %p27, 0, %s26
      %s29 = sadd.s32 1, %s20
      %s30 = scalar_select %p27, %s29, %s20
      %p31 = scmp.ge.s32.totalorder %s30, 2
      %s32 = scalar_select %p31, 0, %s30
      %s33 = ssub.s32 %s20, %s32
      %s34 = ssub.s32 %s21, %s28
      %s35 = sor.u32 %s33, %s34
      %p36 = scmp.eq.s32.totalorder %s35, 0
      %s38 = sadd.s32 %s37, 1
      %s39 = scalar_select %p36, %s37, %s38
      %p42 = pneg %p36
      %p43 = scmp.eq.s32.totalorder %s13, 1
      %p44 = por %p42, %p43
      %p45 = scmp.ne.s32.totalorder %s37, %s40
      %p46 = scmp.eq.s32.totalorder %s13, 0
      %p47 = por %p45, %p46
      %p48 = scmp.ne.s32.totalorder %s37, %s40
      %p49 = scmp.eq.s32.totalorder %s18, 1
      %p50 = por %p48, %p49
      %p51 = scmp.ne.s32.totalorder %s40, %s41
      %p52 = scmp.eq.s32.totalorder %s18, 0
      %p53 = por %p51, %p52
      %p54 = scmp.ne.s32.totalorder %s40, %s41
      %p55 = scmp.eq.s32.totalorder %s19, 1
      %p56 = por %p54, %p55
      %p58 = scmp.ne.s32.totalorder %s41, %s57
      %p59 = scmp.eq.s32.totalorder %s19, 0
      %p60 = por %p58, %p59
      %s61 = ssub.s32 %s20, %s32
      %s62 = ssub.s32 %s21, %s28
      %s63 = sor.u32 %s61, %s62
      %p64 = scmp.eq.s32.totalorder %s63, 0
      %s66 = sadd.s32 %s65, 1
      %s67 = scalar_select %p64, %s65, %s66
      %p70 = pneg %p64
      %p71 = scmp.eq.s32.totalorder %s13, 1
      %p72 = por %p70, %p71
      %p73 = scmp.ne.s32.totalorder %s65, %s68
      %p74 = scmp.eq.s32.totalorder %s13, 0
      %p75 = por %p73, %p74
      %p76 = scmp.ne.s32.totalorder %s65, %s68
      %p77 = scmp.eq.s32.totalorder %s18, 1
      %p78 = por %p76, %p77
      %p79 = scmp.ne.s32.totalorder %s68, %s69
      %p80 = scmp.eq.s32.totalorder %s18, 0
      %p81 = por %p79, %p80
      %p82 = scmp.ne.s32.totalorder %s68, %s69
      %p83 = scmp.eq.s32.totalorder %s19, 1
      %p84 = por %p82, %p83
      %p86 = scmp.ne.s32.totalorder %s69, %s85
      %p87 = scmp.eq.s32.totalorder %s19, 0
      %p88 = por %p86, %p87
      %s90 = sadd.s32 %s89, 1
      %p93 = scmp.eq.s32.totalorder %s13, 1
      %p94 = scmp.ne.s32.totalorder %s89, %s91
      %p95 = scmp.eq.s32.totalorder %s13, 0
      %p96 = por %p94, %p95
      %p97 = scmp.ne.s32.totalorder %s89, %s91
      %p98 = scmp.eq.s32.totalorder %s18, 1
      %p99 = por %p97, %p98
      %p100 = scmp.ne.s32.totalorder %s91, %s92
      %p101 = scmp.eq.s32.totalorder %s18, 0
      %p102 = por %p100, %p101
      %p103 = scmp.ne.s32.totalorder %s91, %s92
      %p104 = scmp.eq.s32.totalorder %s19, 1
      %p105 = por %p103, %p104
      %p107 = scmp.ne.s32.totalorder %s92, %s106
      %p108 = scmp.eq.s32.totalorder %s19, 0
      %p109 = por %p107, %p108
      %s111 = sadd.s32 %s110, 1
      %p114 = scmp.eq.s32.totalorder %s13, 1
      %p115 = scmp.ne.s32.totalorder %s110, %s112
      %p116 = scmp.eq.s32.totalorder %s13, 0
      %p117 = por %p115, %p116
      %p118 = scmp.ne.s32.totalorder %s110, %s112
      %p119 = scmp.eq.s32.totalorder %s18, 1
      %p120 = por %p118, %p119
      %p121 = scmp.ne.s32.totalorder %s112, %s113
      %p122 = scmp.eq.s32.totalorder %s18, 0
      %p123 = por %p121, %p122
      %p124 = scmp.ne.s32.totalorder %s112, %s113
      %p125 = scmp.eq.s32.totalorder %s19, 1
      %p126 = por %p124, %p125
      %p128 = scmp.ne.s32.totalorder %s113, %s127
      %p129 = scmp.eq.s32.totalorder %s19, 0
      %p130 = por %p128, %p129
      %s131 = ssub.s32 %s20, %s32
      %p132 = scmp.eq.s32.totalorder %s131, 0
      %s134 = sadd.s32 %s133, 1
      %s135 = scalar_select %p132, %s133, %s134
      %p138 = pneg %p132
      %p139 = scmp.eq.s32.totalorder %s13, 1
      %p140 = por %p138, %p139
      %p141 = scmp.ne.s32.totalorder %s133, %s136
      %p142 = scmp.eq.s32.totalorder %s13, 0
      %p143 = por %p141, %p142
      %p144 = scmp.ne.s32.totalorder %s133, %s136
      %p145 = scmp.eq.s32.totalorder %s18, 1
      %p146 = por %p144, %p145
      %p147 = scmp.ne.s32.totalorder %s136, %s137
      %p148 = scmp.eq.s32.totalorder %s18, 0
      %p149 = por %p147, %p148
      %p150 = scmp.ne.s32.totalorder %s136, %s137
      %p151 = scmp.eq.s32.totalorder %s19, 1
      %p152 = por %p150, %p151
      %p154 = scmp.ne.s32.totalorder %s137, %s153
      %p155 = scmp.eq.s32.totalorder %s19, 0
      %p156 = por %p154, %p155
      %p157 = scmp.le.s32.totalorder 1, %s13
      %p158 = scmp.lt.s32.totalorder %s13, 3
      %p159 = pnand %p157, %p158
      %p160 = pneg %p159
      // Predicated region
      $region9: #{tpu_custom_call.1} parent=5 // pred_check
        _
      $region10: #{tpu_custom_call.1} parent=5 // pred_check_branch
        %162 = sbr.rel (%p159) target = $region12
      $region11: #{tpu_custom_call.1} parent=5 // pred_region
        %s163 = ssub.s32 %s13, 1
        // Predicated region
        $region13: #{tpu_custom_call.1} parent=11 // pred_check
          %p164 = pneg %p102
        $region14: #{tpu_custom_call.1} parent=11 // pred_check_branch
          %166 = sbr.rel (%p164) target = $region16
        $region15: #{tpu_custom_call.1} parent=11 // pred_region
          _
        $region16: #{tpu_custom_call.1} parent=11 // pred_fallthru
          _
        // Predicated region
        $region17: #{tpu_custom_call.1} parent=11 // pred_check
          %p167 = pneg %p123
        $region18: #{tpu_custom_call.1} parent=11 // pred_check_branch
          %169 = sbr.rel (%p167) target = $region20
        $region19: #{tpu_custom_call.1} parent=11 // pred_region
          _
        $region20: #{tpu_custom_call.1} parent=11 // pred_fallthru
          _
      $region12: #{tpu_custom_call.1} parent=5 // pred_fallthru
        _
      %p170 = scmp.lt.s32.totalorder %s13, 2
      // Predicated region
      $region21: #{tpu_custom_call.1} parent=5 // pred_check
        %p171 = pneg %p170
      $region22: #{tpu_custom_call.1} parent=5 // pred_check_branch
        %173 = sbr.rel (%p171) target = $region24
      $region23: #{tpu_custom_call.1} parent=5 // pred_region
        // Predicated region
        $region25: #{tpu_custom_call.1} parent=23 // pred_check
          %p174 = pneg %p47
        $region26: #{tpu_custom_call.1} parent=23 // pred_check_branch
          %176 = sbr.rel (%p174) target = $region28
        $region27: #{tpu_custom_call.1} parent=23 // pred_region
          %p177 = scmp.lt.s32.totalorder %s20, 1
          %s178 = scalar_select %p177, %s20, 1
          %p179 = scmp.lt.s32.totalorder %s21, 0
          %s180 = scalar_select %p179, %s21, 0
          %s181 = sadd.s32 %s180, %s178
          %s182 = smul.addr %s181, 8
          %s183 = scalar_lea.vmem %s0, %s182
        $region28: #{tpu_custom_call.1} parent=23 // pred_fallthru
          _
        // Predicated region
        $region29: #{tpu_custom_call.1} parent=23 // pred_check
          %p184 = pneg %p75
        $region30: #{tpu_custom_call.1} parent=23 // pred_check_branch
          %186 = sbr.rel (%p184) target = $region32
        $region31: #{tpu_custom_call.1} parent=23 // pred_region
          %p187 = scmp.lt.s32.totalorder %s20, 1
          %s188 = scalar_select %p187, %s20, 1
          %p189 = scmp.lt.s32.totalorder %s21, 0
          %s190 = scalar_select %p189, %s21, 0
          %s191 = sadd.s32 %s190, %s188
          %s192 = smul.addr %s191, 8
          %s193 = scalar_lea.vmem %s1, %s192
        $region32: #{tpu_custom_call.1} parent=23 // pred_fallthru
          _
      $region24: #{tpu_custom_call.1} parent=5 // pred_fallthru
        _
      %p194 = scmp.le.s32.totalorder 1, %s13
      %p195 = scmp.lt.s32.totalorder %s13, 3
      %p196 = pnand %p194, %p195
      %p197 = pneg %p196
      // Predicated region
      $region33: #{tpu_custom_call.1} parent=5 // pred_check
        _
      $region34: #{tpu_custom_call.1} parent=5 // pred_check_branch
        %199 = sbr.rel (%p196) target = $region36
      $region35: #{tpu_custom_call.1} parent=5 // pred_region
        %s200 = ssub.s32 %s13, 1
        %p201 = scmp.lt.s32.totalorder %s22, 1
        %s202 = scalar_select %p201, %s22, 1
        %p203 = scmp.lt.s32.totalorder %s23, 0
        %s204 = scalar_select %p203, %s23, 0
        %s205 = sadd.s32 %s204, %s202
        %s206 = smul.addr %s205, 8
        %s207 = scalar_lea.vmem %s0, %s206
        %p208 = pneg %p53
        %p209 = pneg %p50
        %p210 = scmp.lt.s32.totalorder %s22, 1
        %s211 = scalar_select %p210, %s22, 1
        %p212 = scmp.lt.s32.totalorder %s23, 0
        %s213 = scalar_select %p212, %s23, 0
        %s214 = sadd.s32 %s213, %s211
        %s215 = smul.addr %s214, 8
        %s216 = scalar_lea.vmem %s1, %s215
        %p217 = pneg %p81
        %p218 = pneg %p78
        %p219 = pneg %p102
        %p220 = pneg %p99
        %p221 = pneg %p123
        %p222 = pneg %p120
        %p223 = pneg %p149
        %p224 = pneg %p146
        %s225 = sand.u32 %s136, 1
        %s226 = scalar_lea.sflag [#allocation4], %s225
        %s227 = sand.u32 %s136, 1
        %s228 = scalar_lea.vmem [#allocation3], %s227
        %p229 = scmp.lt.s32.totalorder %s22, 1
        %s230 = scalar_select %p229, %s22, 1
        %p231 = scmp.lt.s32.totalorder %s23, 0
        %s232 = scalar_select %p231, %s23, 0
        %s233 = sadd.s32 %s232, %s230
        %s234 = smul.addr %s233, 8
        %s235 = scalar_lea.vmem %s0, %s234
        %p236 = scmp.lt.s32.totalorder %s22, 1
        %s237 = scalar_select %p236, %s22, 1
        %p238 = scmp.lt.s32.totalorder %s23, 0
        %s239 = scalar_select %p238, %s23, 0
        %s240 = sadd.s32 %s239, %s237
        %s241 = smul.addr %s240, 8
        %s242 = scalar_lea.vmem %s1, %s241
        %p243 = scmp.eq.s32.totalorder %s23, 0
        // Predicated region
        $region37: #{tpu_custom_call.1} parent=35 // pred_check
          %p244 = pneg %p243
        $region38: #{tpu_custom_call.1} parent=35 // pred_check_branch
          %246 = sbr.rel (%p244) target = $region40
        $region39: #{tpu_custom_call.1} parent=35 // pred_region
          %vm247 = vcmask 253952
          %248 = vst.msk [vmem:[#allocation2] sm:$0x1] %vm247, 0.0
        $region40: #{tpu_custom_call.1} parent=35 // pred_fallthru
          _
        %v249 = vld [vmem:[%s235] sm:$0xff]
        %v250 = vld [vmem:[%s242] sm:$0xff]
        %vm251 = vcmp.eq.s32.totalorder %v249, 1
        %v252 = vsel %vm251, 1, 0
        %253 = vset.pattern.permute.xlu0 0
        %254 = vperm.xlu0 %253, %v252
        %v255 = vpop.permute.xlu0 %254
        %vm256 = vcmp.eq.s32.totalorder %v255, 1
        %v257 = vsel %vm256, 0.0, %v250
        %v258 = vld [vmem:[#allocation2] sm:$0x1]
        %vm259 = vcmask 261120
        %v260 = vsel %vm259, %v257, 0.0
        %v261 = vrot.slane %v260, 4
        %v262 = vadd.f32 %v260, %v261
        %v263 = vrot.slane %v262, 2
        %v264 = vadd.f32 %v262, %v263
        %v265 = vrot.slane %v264, 1
        %v266 = vadd.f32 %v264, %v265
        %v267 = vadd.f32 %v258, %v266
        %vm268 = vcmask 253952
        %269 = vst.msk [vmem:[#allocation2] sm:$0x1] %vm268, %v267
        // Predicated region
        $region41: #{tpu_custom_call.1} parent=35 // pred_check
          %p270 = pneg %p243
        $region42: #{tpu_custom_call.1} parent=35 // pred_check_branch
          %272 = sbr.rel (%p270) target = $region44
        $region43: #{tpu_custom_call.1} parent=35 // pred_region
          %v273 = vld [vmem:[#allocation2] sm:$0x1]
          %v274 = vmul.f32 %v273, 0.125
          %v275 = vld [vmem:[%s2] sm:$0xff]
          %v276 = vld [vmem:[%s2 + $0x8] sm:$0xff]
          %v277 = vld [vmem:[%s2 + $0x10] sm:$0xff]
          %v278 = vld [vmem:[%s2 + $0x18] sm:$0xff]
          %v279 = vld [vmem:[%s3] sm:$0x1]
          %v281 = vsel %vm259, %v274, 0
          %283 = vmatprep.subr.mxu0 0.0
          %284 = vmatpush1.msra.mxu0 %v275
          %285 = vmatprep.subr.mxu0 0.0
          %286 = vmatpush1.msra.mxu0 %v276
          %287 = vmatprep.subr.mxu0 0.0
          %288 = vmatpush1.msra.mxu0 %v277
          %289 = vmatprep.subr.mxu0 0.0
          %290 = vmatpush1.msra.mxu0 %v278
          %291 = vmatprep.subr.mxu0 0.0
          %292 = vmatpush1.msra.mxu0 0.0
          %293 = vmatprep.subr.mxu0 0.0
          %294 = vmatpush1.msra.mxu0 0.0
          %295 = vmatprep.subr.mxu0 0.0
          %296 = vmatpush1.msra.mxu0 0.0
          %297 = vmatprep.subr.mxu0 0.0
          %298 = vmatpush1.msra.mxu0 0.0
          %299 = vmatprep.subr.mxu0 0.0
          %300 = vmatpush1.msra.mxu0 0.0
          %301 = vmatprep.subr.mxu0 0.0
          %302 = vmatpush1.msra.mxu0 0.0
          %303 = vmatprep.subr.mxu0 0.0
          %304 = vmatpush1.msra.mxu0 0.0
          %305 = vmatprep.subr.mxu0 0.0
          %306 = vmatpush1.msra.mxu0 0.0
          %307 = vmatprep.subr.mxu0 0.0
          %308 = vmatpush1.msra.mxu0 0.0
          %309 = vmatprep.subr.mxu0 0.0
          %310 = vmatpush1.msra.mxu0 0.0
          %311 = vmatprep.subr.mxu0 0.0
          %312 = vmatpush1.msra.mxu0 0.0
          %313 = vmatprep.subr.mxu0 0.0
          %314 = vmatpush1.msra.mxu0 0.0
          %315 = vmatprep.subr.mxu0 0.0
          %316 = vmatpush1.msra.mxu0 0.0
          %317 = vmatprep.subr.mxu0 0.0
          %318 = vmatpush1.msra.mxu0 0.0
          %319 = vmatprep.subr.mxu0 0.0
          %320 = vmatpush1.msra.mxu0 0.0
          %321 = vmatprep.subr.mxu0 0.0
          %322 = vmatpush1.msra.mxu0 0.0
          %323 = vmatprep.subr.mxu0 0.0
          %324 = vmatpush1.msra.mxu0 0.0
          %325 = vmatprep.subr.mxu0 0.0
          %326 = vmatpush1.msra.mxu0 0.0
          %327 = vmatprep.subr.mxu0 0.0
          %328 = vmatpush1.msra.mxu0 0.0
          %329 = vmatprep.subr.mxu0 0.0
          %330 = vmatpush1.msra.mxu0 0.0
          %331 = vmatprep.subr.mxu0 0.0
          %332 = vmatpush1.msra.mxu0 0.0
          %333 = vmatprep.subr.mxu0 0.0
          %334 = vmatpush1.msra.mxu0 0.0
          %335 = vmatprep.subr.mxu0 0.0
          %336 = vmatpush1.msra.mxu0 0.0
          %337 = vmatprep.subr.mxu0 0.0
          %338 = vmatpush1.msra.mxu0 0.0
          %339 = vmatprep.subr.mxu0 0.0
          %340 = vmatpush1.msra.mxu0 0.0
          %341 = vmatprep.subr.mxu0 0.0
          %342 = vmatpush1.msra.mxu0 0.0
          %343 = vmatprep.subr.mxu0 0.0
          %344 = vmatpush1.msra.mxu0 0.0
          %345 = vmatprep.subr.mxu0 0.0
          %346 = vmatpush1.msra.mxu0 0.0
          %347 = vmatprep.mubr.f32.mxu0 0.0
          %348 = vmatmul.mubr.f32.gmra.mrb[0].mxu0 %v281
          %v349 = vpop.f32.mrb[0].mxu0
          %v350 = vadd.f32 %v279, %v349
          %v351 = vpop.f32.mrb[0].mxu0
          %352 = vdwg.mxu0
          %vm353 = vcmask 8192
          %354 = vst.msk [vmem:[%s228] sm:$0x1] %vm353, %v350
        $region44: #{tpu_custom_call.1} parent=35 // pred_fallthru
          _
        %s355 = sand.u32 %s136, 1
        %s356 = scalar_lea.sflag [#allocation4], %s355
        %s357 = sand.u32 %s136, 1
        %s358 = scalar_lea.vmem [#allocation3], %s357
        // Predicated region
        $region45: #{tpu_custom_call.1} parent=35 // pred_check
          %p359 = pneg %p146
        $region46: #{tpu_custom_call.1} parent=35 // pred_check_branch
          %361 = sbr.rel (%p359) target = $region48
        $region47: #{tpu_custom_call.1} parent=35 // pred_region
          %s363 = ssub.s32 16, 16
          %364 = vsyncadd %s356, %s363
          %s365 = smul.addr %s22, 16
          %s366 = scalar_lea.hbm %s4, %s365
          %s368 = sshll.u32 %s358, 4
          %s369 = int_to_ptr.vmem [resolvable:$true] %s368
          %371 = dma.vmem_to_hbm [thread:$0]  %s369, 16, %s366, %s356
        $region48: #{tpu_custom_call.1} parent=35 // pred_fallthru
          _
      $region36: #{tpu_custom_call.1} parent=5 // pred_fallthru
        _
      %p372 = scmp.le.s32.totalorder 2, %s13
      // Predicated region
      $region49: #{tpu_custom_call.1} parent=5 // pred_check
        %p373 = pneg %p372
      $region50: #{tpu_custom_call.1} parent=5 // pred_check_branch
        %375 = sbr.rel (%p373) target = $region52
      $region51: #{tpu_custom_call.1} parent=5 // pred_region
        %s376 = ssub.s32 %s13, 2
        // Predicated region
        $region53: #{tpu_custom_call.1} parent=51 // pred_check
          %p377 = pneg %p152
        $region54: #{tpu_custom_call.1} parent=51 // pred_check_branch
          %379 = sbr.rel (%p377) target = $region56
        $region55: #{tpu_custom_call.1} parent=51 // pred_region
          %s380 = sand.u32 %s137, 1
          %s381 = scalar_lea.sflag [#allocation4], %s380
          %s382 = sand.u32 %s137, 1
          %s383 = scalar_lea.vmem [#allocation3], %s382
          %384 = dma.done %s381, 16
        $region56: #{tpu_custom_call.1} parent=51 // pred_fallthru
          _
      $region52: #{tpu_custom_call.1} parent=5 // pred_fallthru
        _
    $region6: #{tpu_custom_call.1} parent=1 // loop_footer
      %s17 = sadd.s32 1, %s13
    $region7: #{tpu_custom_call.1} parent=1 // loop_footer_branch
      %12 = sbr.rel target = $region3
    $region8: #{tpu_custom_call.1} parent=1 // loop_exit
      _
    %385 = vsyncpa [#allocation4], 1
    %s386 = scalar_lea.sflag [#allocation4], 1
    %387 = vsyncpa %s386, 1

</llo_original>
